<compile_context>
chip_gen: v7x
topology: tpu7x:2x2x1
jax: 0.10.0
libtpu: 0.0.40
codegen_flags: <defaults>
</compile_context>

<pallas_src>
import numpy as np
import jax
import jax.numpy as jnp
from jax.experimental import pallas as pl
from jax.experimental.pallas import tpu as pltpu


def _round_up(x: int, m: int) -> int:
    return ((x + m - 1) // m) * m


def equal_kernel(x_ref, c_ref, o_ref):
    # Pure VPU elementwise compare; result stored directly as bool mask.
    o_ref[...] = x_ref[...] == c_ref[...]


def equal_pallas(x, c1):
    """x: f32[N, C, H, W]; c1: f32[1, C, H, W] -> bool[N, C, H, W]."""
    # NOTE: for a standalone 36-element op, plain (x == c1) in XLA would be
    # faster than any pallas_call; this kernel is the fused / large-tensor
    # path and is structured to hit the HBM roofline at scale.
    orig_shape = x.shape
    assert c1.shape[0] == 1 and c1.shape[1:] == x.shape[1:], (
        "constant must broadcast over batch only")

    # Resolve the (cheap) broadcast in the wrapper so the kernel sees one
    # flat lane-dense problem.
    c = jnp.broadcast_to(c1.astype(x.dtype), x.shape)

    total = int(np.prod(orig_shape))

    # Lane-dense 2D layout: last dim a multiple of 128, rows a multiple of 8.
    cols = 512 if total >= 512 * 8 else 128
    rows = -(-total // cols)                      # ceil-div
    tile_rows = min(1024, _round_up(rows, 8))     # 512-1024-row tiles amortize
                                                  # the ~0.35us per-step cost
    rows_padded = _round_up(rows, tile_rows)
    num_tiles = rows_padded // tile_rows
    padded_total = rows_padded * cols

    x_flat = x.reshape(-1)
    c_flat = c.reshape(-1)
    pad = padded_total - total
    if pad:
        x_flat = jnp.pad(x_flat, (0, pad), constant_values=0.0)
        c_flat = jnp.pad(c_flat, (0, pad), constant_values=1.0)
    x2d = x_flat.reshape(rows_padded, cols)
    c2d = c_flat.reshape(rows_padded, cols)

    out2d = pl.pallas_call(
        equal_kernel,
        out_shape=jax.ShapeDtypeStruct((rows_padded, cols), jnp.bool_),
        grid=(num_tiles,),
        in_specs=[
            pl.BlockSpec((tile_rows, cols), lambda i: (i, 0)),
            pl.BlockSpec((tile_rows, cols), lambda i: (i, 0)),
        ],
        out_specs=pl.BlockSpec((tile_rows, cols), lambda i: (i, 0)),
        compiler_params=pltpu.CompilerParams(
            dimension_semantics=("parallel",),
        ),
    )(x2d, c2d)

    # Strip padding and restore the original NCHW shape.
    return out2d.reshape(-1)[:total].reshape(orig_shape)


if __name__ == "__main__":
    # Constant C1: same construction as the PyTorch module (seed 123).
    rng = np.random.default_rng(seed=123)
    c1 = jnp.asarray(rng.random((1, 2, 3, 3), dtype=np.float32))

    # Small R4 input consistent with the module (broadcasts against (1,2,3,3)).
    key = jax.random.PRNGKey(0)
    x = jax.random.uniform(key, (2, 2, 3, 3), dtype=jnp.float32)
    # Plant exact matches so the Equal op yields a mix of True / False.
    x = x.at[:, :, 0, :].set(c1[:, :, 0, :])

    out = equal_pallas(x, c1)
    jax.block_until_ready(out)

    # Reference: same semantics as torch.eq (exact compare, NaN != NaN).
    ref = (x == c1)
    assert out.dtype == jnp.bool_, out.dtype
    assert out.shape == (2, 2, 3, 3), out.shape
    assert bool(jnp.all(out == ref))

    print("KERNEL_OK")
</pallas_src>

<mosaic_0001>
module attributes {stable_mosaic.version = 11 : i64} {
  func.func @equal_kernel(%arg0: i32, %arg1: memref<8x128xf32, #tpu.memory_space<vmem>>, %arg2: memref<8x128xf32, #tpu.memory_space<vmem>>, %arg3: memref<8x128xi32, #tpu.memory_space<vmem>>) attributes {dimension_semantics = [#tpu.dimension_semantics<parallel>], iteration_bounds = array<i64: 1>, scalar_prefetch = 0 : i64, scratch_operands = 0 : i64, tpu.core_type = #tpu.core_type<tc>, window_params = [{transform_indices = @transform_0, window_bounds = array<i64: 8, 128>}, {transform_indices = @transform_1, window_bounds = array<i64: 8, 128>}, {transform_indices = @transform_2, window_bounds = array<i64: 8, 128>}]} {
    %c0 = arith.constant 0 : index
    %c0_0 = arith.constant 0 : index
    %0 = vector.load %arg1[%c0, %c0_0] : memref<8x128xf32, #tpu.memory_space<vmem>>, vector<8x128xf32>
    %c0_1 = arith.constant 0 : index
    %c0_2 = arith.constant 0 : index
    %1 = vector.load %arg2[%c0_1, %c0_2] : memref<8x128xf32, #tpu.memory_space<vmem>>, vector<8x128xf32>
    %2 = arith.cmpf oeq, %0, %1 : vector<8x128xf32>
    %c0_3 = arith.constant 0 : index
    %c0_4 = arith.constant 0 : index
    %3 = vector.load %arg3[%c0_3, %c0_4] : memref<8x128xi32, #tpu.memory_space<vmem>>, vector<8x128xi32>
    %4 = arith.extui %2 : vector<8x128xi1> to vector<8x128xi32>
    %cst = arith.constant dense<0> : vector<8x128xi32>
    %5 = arith.cmpi ne, %3, %cst : vector<8x128xi32>
    tpu.vector_store %arg3[%c0_3, %c0_4], %4 {strides = array<i32>} : memref<8x128xi32, #tpu.memory_space<vmem>>, vector<8x128xi32>,
    return
  }
  func.func @transform_0(%arg0: i32) -> (i32, i32) {
    %c0_i32 = arith.constant 0 : i32
    %c0_i32_0 = arith.constant 0 : i32
    return %arg0, %c0_i32 : i32, i32
  }
  func.func @transform_1(%arg0: i32) -> (i32, i32) {
    %c0_i32 = arith.constant 0 : i32
    %c0_i32_0 = arith.constant 0 : i32
    return %arg0, %c0_i32 : i32, i32
  }
  func.func @transform_2(%arg0: i32) -> (i32, i32) {
    %c0_i32 = arith.constant 0 : i32
    %c0_i32_0 = arith.constant 0 : i32
    return %arg0, %c0_i32 : i32, i32
  }
}

</mosaic_0001>

<llo_original>
// kernel: tpu_custom_call.1
$region0: #{tpu_custom_call.1}
  #allocation0 [shape = 'u32[]', space=smem, size = 0x4, offset = 0x4, fixed_abs, tag = 'smem constant byte address 0x4 - core index']
  #allocation1 [shape = 'u32[144,128]{1,0:T(1,128)}', space=vmem, size = 0x12000, scoped, tag = 'internal scratch']
  %s0 = inlined_call_operand.hbm [shape: f32[8,128], index: 0, kind: input, shape index: {}]
  %s1 = inlined_call_operand.hbm [shape: f32[8,128], index: 1, kind: input, shape index: {}]
  %s2 = inlined_call_operand.vmem [shape: s32[8,128], index: 2, kind: output, shape index: {}]
  %s3 = sld [smem:[#allocation0]]
  $region26: #{tpu_custom_call.1} parent=0
    _
  %s5 = ssub.s32 1, %s3
  %s6 = scalar_select 0, %s5, %s3
  $region1: #{tpu_custom_call.1} parent=0
    #allocation2 [shape = 'u8[4096]{0}', space=vmem, size = 0x1000, scoped, tag = 'input window, operand 0, single buffered']
    #allocation3 [shape = 's32[1]{0}', space=sflag, size = 0x4, scoped, tag = 'scoped memory for tpu_custom_call.1']
    #allocation4 [shape = 'u8[4096]{0}', space=vmem, size = 0x1000, scoped, tag = 'input window, operand 1, single buffered']
    #allocation5 [shape = 's32[1]{0}', space=sflag, size = 0x4, scoped, tag = 'scoped memory for tpu_custom_call.1']
    %7 = vsyncpa [#allocation3], 0
    %8 = vsyncpa [#allocation5], 0
    // Predicated region
    $region2: #{tpu_custom_call.1} parent=1 // pred_check
      _
    $region3: #{tpu_custom_call.1} parent=1 // pred_check_branch
      %10 = sbr.rel (0) target = $region5
    $region4: #{tpu_custom_call.1} parent=1 // pred_region
      %s12 = ssub.s32 128, 128
      %13 = vsyncadd [#allocation3], %s12
      %s15 = sshll.u32 [#allocation2], 4
      %s16 = int_to_ptr.vmem [resolvable:$true] %s15
      %18 = dma.hbm_to_vmem [thread:$0]  %s0, 128, %s16, [#allocation3]
    $region5: #{tpu_custom_call.1} parent=1 // pred_fallthru
      _
    // Predicated region
    $region6: #{tpu_custom_call.1} parent=1 // pred_check
      _
    $region7: #{tpu_custom_call.1} parent=1 // pred_check_branch
      %20 = sbr.rel (0) target = $region9
    $region8: #{tpu_custom_call.1} parent=1 // pred_region
      %s22 = ssub.s32 128, 128
      %23 = vsyncadd [#allocation5], %s22
      %s25 = sshll.u32 [#allocation4], 4
      %s26 = int_to_ptr.vmem [resolvable:$true] %s25
      %28 = dma.hbm_to_vmem [thread:$0]  %s1, 128, %s26, [#allocation5]
    $region9: #{tpu_custom_call.1} parent=1 // pred_fallthru
      _
    // Predicated region
    $region10: #{tpu_custom_call.1} parent=1 // pred_check
      _
    $region11: #{tpu_custom_call.1} parent=1 // pred_check_branch
      %30 = sbr.rel (0) target = $region13
    $region12: #{tpu_custom_call.1} parent=1 // pred_region
      %31 = dma.done [#allocation3], 128
    $region13: #{tpu_custom_call.1} parent=1 // pred_fallthru
      _
    // Predicated region
    $region14: #{tpu_custom_call.1} parent=1 // pred_check
      _
    $region15: #{tpu_custom_call.1} parent=1 // pred_check_branch
      %33 = sbr.rel (0) target = $region17
    $region16: #{tpu_custom_call.1} parent=1 // pred_region
      %34 = dma.done [#allocation5], 128
    $region17: #{tpu_custom_call.1} parent=1 // pred_fallthru
      _
    %v35 = vld [vmem:[#allocation2] sm:$0xff]
    %v36 = vld [vmem:[#allocation4] sm:$0xff]
    %vm37 = vcmp.eq.f32.partialorder %v35, %v36
    %v38 = vsel %vm37, 1, 0
    %39 = vst [vmem:[%s2] sm:$0xff] %v38
    // Predicated region
    $region18: #{tpu_custom_call.1} parent=1 // pred_check
      _
    $region19: #{tpu_custom_call.1} parent=1 // pred_check_branch
      %41 = sbr.rel (0) target = $region21
    $region20: #{tpu_custom_call.1} parent=1 // pred_region
      _
    $region21: #{tpu_custom_call.1} parent=1 // pred_fallthru
      _
    // Predicated region
    $region22: #{tpu_custom_call.1} parent=1 // pred_check
      _
    $region23: #{tpu_custom_call.1} parent=1 // pred_check_branch
      %43 = sbr.rel (0) target = $region25
    $region24: #{tpu_custom_call.1} parent=1 // pred_region
      _
    $region25: #{tpu_custom_call.1} parent=1 // pred_fallthru
      _
    %44 = vsyncpa [#allocation3], 1
    %45 = vsyncpa [#allocation5], 1

</llo_original>
